<compile_context>
chip_gen: v7x
topology: tpu7x:2x2x1
jax: 0.10.0
libtpu: 0.0.40
codegen_flags: <defaults>
</compile_context>

<pallas_src>
import functools

import jax
import jax.numpy as jnp
from jax.experimental import pallas as pl
from jax.experimental.pallas import tpu as pltpu

INPUT_SIZE = 256
KEY_SIZE = 256


def keygen_kernel(x_ref, w_ref, b_ref, o_ref):
    # MXU: (block_b, in) @ (in, out); accumulate in f32 regardless of input dtype.
    x = x_ref[...].astype(w_ref.dtype)              # in-VMEM cast (free-ish), not a wrapper pass
    z = jnp.dot(x, w_ref[...], preferred_element_type=jnp.float32)
    z = z + b_ref[...]                              # f32 bias add (VPU)
    # Exact sigmoid with a single EUP op: sigmoid(z) = 0.5*tanh(0.5*z) + 0.5.
    o_ref[...] = (0.5 * jnp.tanh(0.5 * z) + 0.5).astype(o_ref.dtype)


def _round_up(n, m):
    return ((n + m - 1) // m) * m


def _auto_block_b(B):
    """Pick the batch tile: big for HBM efficiency, but >= 2 grid steps when
    possible so the 'parallel' axis can shard across v7x's two TensorCores."""
    if B <= 256:
        return B                                    # single full-extent block, no padding needed
    half = _round_up(pl.cdiv(B, 2), 256)            # keep >= 2 even-ish steps, 256-aligned for MXU
    return min(1024, half)                          # 512-1024 tiles sit at ~85% of HBM roofline


@functools.partial(jax.jit, static_argnames=("block_b", "out_dtype"))
def keygen_forward(x, params, *, block_b=None, out_dtype=jnp.float32):
    w, b = params
    B, in_dim = x.shape
    out_dim = w.shape[1]

    if block_b is None:
        block_b = _auto_block_b(B)

    grid = (pl.cdiv(B, block_b),)                   # ragged B handled by masked partial last block

    out_itemsize = jnp.dtype(out_dtype).itemsize
    cost = pl.CostEstimate(
        flops=2 * B * in_dim * out_dim,
        transcendentals=B * out_dim,
        bytes_accessed=(x.size * x.dtype.itemsize
                        + w.size * w.dtype.itemsize
                        + b.size * b.dtype.itemsize
                        + B * out_dim * out_itemsize),
    )

    return pl.pallas_call(
        keygen_kernel,
        out_shape=jax.ShapeDtypeStruct((B, out_dim), out_dtype),
        grid_spec=pltpu.PrefetchScalarGridSpec(
            num_scalar_prefetch=0,
            grid=grid,
            in_specs=[
                pl.BlockSpec((block_b, in_dim), lambda i: (i, 0)),   # x tile (M axis)
                pl.BlockSpec((in_dim, out_dim), lambda i: (0, 0)),   # W (stationary)
                pl.BlockSpec((1, out_dim), lambda i: (0, 0)),        # bias (stationary)
            ],
            out_specs=pl.BlockSpec((block_b, out_dim), lambda i: (i, 0)),
        ),
        compiler_params=pltpu.CompilerParams(
            dimension_semantics=("parallel",),
        ),
        cost_estimate=cost,
    )(x, w, b)


def init_params(key, input_size, key_size):
    """Deterministic init mimicking PyTorch nn.Linear (uniform +-1/sqrt(fan_in)).
    Weight stored transposed as (in_features, out_features) so the kernel does x @ W."""
    kw, kb = jax.random.split(key)
    bound = 1.0 / jnp.sqrt(input_size)
    w = jax.random.uniform(kw, (input_size, key_size), jnp.float32, -bound, bound)
    b = jax.random.uniform(kb, (1, key_size), jnp.float32, -bound, bound)
    return (w, b)


def params_to_bf16(params):
    """One-time, outside-the-hot-path conversion: weight -> bf16 (halves weight
    DMA / VMEM), bias stays f32 for the f32 accumulate path."""
    w, b = params
    return (w.astype(jnp.bfloat16), b)


def keygen_reference(x, params):
    w, b = params
    return jax.nn.sigmoid(x @ w + b)


if __name__ == "__main__":
    key = jax.random.PRNGKey(0)
    k_x, k_p = jax.random.split(key)

    params_f32 = init_params(k_p, INPUT_SIZE, KEY_SIZE)
    params_fast = params_to_bf16(params_f32)        # converted once, not per call

    # Test 1: throughput-shaped path. B=512 -> auto block_b=256, grid=2
    # "parallel" steps (keeps both v7x TCs busy), bf16 weights + bf16 output.
    batch = 512
    x = jax.random.normal(k_x, (batch, INPUT_SIZE), jnp.float32)
    out = jax.block_until_ready(
        keygen_forward(x, params_fast, out_dtype=jnp.bfloat16))
    ref = keygen_reference(x, params_f32)
    assert out.shape == (batch, KEY_SIZE)
    assert jnp.allclose(out.astype(jnp.float32), ref, atol=2e-2, rtol=2e-2), \
        float(jnp.max(jnp.abs(out.astype(jnp.float32) - ref)))

    # Test 2: ragged batch, no padding — masked partial last block (200 rows,
    # block_b=128 -> grid=2, last block half-masked). Full f32, tight numerics.
    x2 = jax.random.normal(k_x, (200, INPUT_SIZE), jnp.float32)
    out2 = jax.block_until_ready(
        keygen_forward(x2, params_f32, block_b=128, out_dtype=jnp.float32))
    ref2 = keygen_reference(x2, params_f32)
    assert out2.shape == (200, KEY_SIZE)
    assert jnp.allclose(out2, ref2, atol=5e-3, rtol=5e-3), \
        float(jnp.max(jnp.abs(out2 - ref2)))

    print("KERNEL_OK")
</pallas_src>

<mosaic_0001>
module attributes {stable_mosaic.version = 11 : i64} {
  func.func @keygen_kernel(%arg0: i32, %arg1: memref<256x256xf32, #tpu.memory_space<vmem>>, %arg2: memref<256x256xbf16, #tpu.memory_space<vmem>>, %arg3: memref<1x256xf32, #tpu.memory_space<vmem>>, %arg4: memref<256x256xbf16, #tpu.memory_space<vmem>>) attributes {dimension_semantics = [#tpu.dimension_semantics<parallel>], iteration_bounds = array<i64: 2>, scalar_prefetch = 0 : i64, scratch_operands = 0 : i64, tpu.core_type = #tpu.core_type<tc>, window_params = [{transform_indices = @transform_0, window_bounds = array<i64: 256, 256>}, {pipeline_mode = #tpu.pipeline_mode<synchronous>, transform_indices = @transform_1, window_bounds = array<i64: 256, 256>}, {pipeline_mode = #tpu.pipeline_mode<synchronous>, transform_indices = @transform_2, window_bounds = array<i64: 1, 256>}, {transform_indices = @transform_3, window_bounds = array<i64: 256, 256>}]} {
    %c0 = arith.constant 0 : index
    %c0_0 = arith.constant 0 : index
    %0 = vector.load %arg1[%c0, %c0_0] : memref<256x256xf32, #tpu.memory_space<vmem>>, vector<256x256xf32>
    %1 = arith.truncf %0 : vector<256x256xf32> to vector<256x256xbf16>
    %c0_1 = arith.constant 0 : index
    %c0_2 = arith.constant 0 : index
    %2 = vector.load %arg2[%c0_1, %c0_2] : memref<256x256xbf16, #tpu.memory_space<vmem>>, vector<256x256xbf16>
    %cst = arith.constant dense<0.000000e+00> : vector<256x256xf32>
    %3 = tpu.matmul %1, %2, %cst {dimension_numbers = #tpu.dot_dimension_numbers<[1], [0], [0], [1], [0, 0, 1, 1], [], []>} : vector<256x256xbf16>, vector<256x256xbf16>, vector<256x256xf32> -> vector<256x256xf32>
    %c0_3 = arith.constant 0 : index
    %c0_4 = arith.constant 0 : index
    %4 = vector.load %arg3[%c0_3, %c0_4] : memref<1x256xf32, #tpu.memory_space<vmem>>, vector<1x256xf32>
    %5 = vector.broadcast %4 : vector<1x256xf32> to vector<256x256xf32>
    %6 = arith.addf %3, %5 : vector<256x256xf32>
    %cst_5 = arith.constant 5.000000e-01 : f32
    %7 = vector.broadcast %cst_5 : f32 to vector<256x256xf32>
    %8 = arith.mulf %7, %6 : vector<256x256xf32>
    %9 = math.tanh %8 : vector<256x256xf32>
    %cst_6 = arith.constant 5.000000e-01 : f32
    %10 = vector.broadcast %cst_6 : f32 to vector<256x256xf32>
    %11 = arith.mulf %10, %9 : vector<256x256xf32>
    %cst_7 = arith.constant 5.000000e-01 : f32
    %12 = vector.broadcast %cst_7 : f32 to vector<256x256xf32>
    %13 = arith.addf %11, %12 : vector<256x256xf32>
    %14 = arith.truncf %13 : vector<256x256xf32> to vector<256x256xbf16>
    %c0_8 = arith.constant 0 : index
    %c0_9 = arith.constant 0 : index
    %15 = vector.load %arg4[%c0_8, %c0_9] : memref<256x256xbf16, #tpu.memory_space<vmem>>, vector<256x256xbf16>
    tpu.vector_store %arg4[%c0_8, %c0_9], %14 {strides = array<i32>} : memref<256x256xbf16, #tpu.memory_space<vmem>>, vector<256x256xbf16>,
    return
  }
  func.func @transform_0(%arg0: i32) -> (i32, i32) {
    %c0_i32 = arith.constant 0 : i32
    %c0_i32_0 = arith.constant 0 : i32
    return %arg0, %c0_i32 : i32, i32
  }
  func.func @transform_1(%arg0: i32) -> (i32, i32) {
    %c0_i32 = arith.constant 0 : i32
    %c0_i32_0 = arith.constant 0 : i32
    %c0_i32_1 = arith.constant 0 : i32
    return %c0_i32, %c0_i32_0 : i32, i32
  }
  func.func @transform_2(%arg0: i32) -> (i32, i32) {
    %c0_i32 = arith.constant 0 : i32
    %c0_i32_0 = arith.constant 0 : i32
    %c0_i32_1 = arith.constant 0 : i32
    return %c0_i32, %c0_i32_0 : i32, i32
  }
  func.func @transform_3(%arg0: i32) -> (i32, i32) {
    %c0_i32 = arith.constant 0 : i32
    %c0_i32_0 = arith.constant 0 : i32
    return %arg0, %c0_i32 : i32, i32
  }
}

</mosaic_0001>

<llo_original>
// kernel: keygen_forward.1
$region0: #{keygen_forward.1}
  #allocation0 [shape = 'u32[]', space=smem, size = 0x4, offset = 0x4, fixed_abs, tag = 'smem constant byte address 0x4 - core index']
  #allocation1 [shape = 'u32[144,128]{1,0:T(1,128)}', space=vmem, size = 0x12000, scoped, tag = 'internal scratch']
  %s0 = inlined_call_operand.hbm [shape: f32[512,256], index: 0, kind: input, shape index: {}]
  %s1 = inlined_call_operand.hbm [shape: bf16[256,256], index: 1, kind: input, shape index: {}]
  %s2 = inlined_call_operand.vmem [shape: f32[1,256], index: 2, kind: input, shape index: {}]
  %s3 = inlined_call_operand.hbm [shape: bf16[512,256], index: 3, kind: output, shape index: {}]
  %s4 = sld [smem:[#allocation0]]
  $region53: #{keygen_forward.1} parent=0
    _
  %s6 = ssub.s32 1, %s4
  %s7 = scalar_select 0, %s6, %s4
  $region1: #{keygen_forward.1} parent=0
    #allocation2 [shape = 'u8[524288]{0}', space=vmem, size = 0x80000, scoped, tag = 'input window, operand 0']
    #allocation3 [shape = 's32[2]{0}', space=sflag, size = 0x8, scoped, tag = 'scoped memory for keygen_forward.1']
    #allocation4 [shape = 's32[2]{0}', space=sflag, size = 0x8, scoped, tag = 'scoped memory for keygen_forward.1']
    #allocation5 [shape = 'u8[131072]{0}', space=vmem, size = 0x20000, scoped, tag = 'input window, operand 1, single buffered']
    #allocation6 [shape = 's32[1]{0}', space=sflag, size = 0x4, scoped, tag = 'scoped memory for keygen_forward.1']
    #allocation7 [shape = 'u8[262144]{0}', space=vmem, size = 0x40000, scoped, tag = 'output window, operand 0']
    %8 = vsyncpa [#allocation3], 0
    %s9 = scalar_lea.sflag [#allocation3], 1
    %10 = vsyncpa %s9, 0
    %11 = vsyncpa [#allocation6], 0
    %12 = vsyncpa [#allocation4], 0
    %s13 = scalar_lea.sflag [#allocation4], 1
    %14 = vsyncpa %s13, 0
    loop: start=0, step=1, limit=4
    $region2: #{keygen_forward.1} parent=1 // loop_pre_header
      _
    $region3: #{keygen_forward.1} parent=1 // loop_header
      %s16 = sphi 0, %s20
      %p17 = scmp.ge.s32.totalorder %s16, 4
      %s26 = sphi 0, %s28
      %s29 = sphi 0, %s26
      %s30 = sphi 0, %s29
      %s46 = sphi 0, %s30
      %s50 = sphi 0, %s50
      %s52 = sphi 0, %s50
      %s53 = sphi 0, %s52
      %s67 = sphi 0, %s53
      %s71 = sphi 0, %s71
      %s73 = sphi 0, %s71
      %s74 = sphi 0, %s73
      %s88 = sphi 0, %s74
      %s94 = sphi 0, %s96
      %s97 = sphi 0, %s94
      %s98 = sphi 0, %s97
      %s114 = sphi 0, %s98
    $region4: #{keygen_forward.1} parent=1 // loop_header_branch
      %19 = sbr.rel (%p17) target = $region8
    $region5: #{keygen_forward.1} parent=1 // loop_body
      %s21 = ssub.s32 %s16, 1
      %s22 = ssub.s32 %s16, 2
      %s23 = sadd.s32 %s16, 1
      %s24 = ssub.s32 %s16, %s23
      %p25 = scmp.eq.s32.totalorder %s24, 0
      %s27 = sadd.s32 %s26, 1
      %s28 = scalar_select %p25, %s26, %s27
      %p31 = pneg %p25
      %p32 = scmp.eq.s32.totalorder %s16, 1
      %p33 = por %p31, %p32
      %p34 = scmp.ne.s32.totalorder %s26, %s29
      %p35 = scmp.eq.s32.totalorder %s16, 0
      %p36 = por %p34, %p35
      %p37 = scmp.ne.s32.totalorder %s26, %s29
      %p38 = scmp.eq.s32.totalorder %s21, 1
      %p39 = por %p37, %p38
      %p40 = scmp.ne.s32.totalorder %s29, %s30
      %p41 = scmp.eq.s32.totalorder %s21, 0
      %p42 = por %p40, %p41
      %p43 = scmp.ne.s32.totalorder %s29, %s30
      %p44 = scmp.eq.s32.totalorder %s22, 1
      %p45 = por %p43, %p44
      %p47 = scmp.ne.s32.totalorder %s30, %s46
      %p48 = scmp.eq.s32.totalorder %s22, 0
      %p49 = por %p47, %p48
      %s51 = sadd.s32 %s50, 1
      %p54 = scmp.eq.s32.totalorder %s16, 1
      %p55 = scmp.ne.s32.totalorder %s50, %s52
      %p56 = scmp.eq.s32.totalorder %s16, 0
      %p57 = por %p55, %p56
      %p58 = scmp.ne.s32.totalorder %s50, %s52
      %p59 = scmp.eq.s32.totalorder %s21, 1
      %p60 = por %p58, %p59
      %p61 = scmp.ne.s32.totalorder %s52, %s53
      %p62 = scmp.eq.s32.totalorder %s21, 0
      %p63 = por %p61, %p62
      %p64 = scmp.ne.s32.totalorder %s52, %s53
      %p65 = scmp.eq.s32.totalorder %s22, 1
      %p66 = por %p64, %p65
      %p68 = scmp.ne.s32.totalorder %s53, %s67
      %p69 = scmp.eq.s32.totalorder %s22, 0
      %p70 = por %p68, %p69
      %s72 = sadd.s32 %s71, 1
      %p75 = scmp.eq.s32.totalorder %s16, 1
      %p76 = scmp.ne.s32.totalorder %s71, %s73
      %p77 = scmp.eq.s32.totalorder %s16, 0
      %p78 = por %p76, %p77
      %p79 = scmp.ne.s32.totalorder %s71, %s73
      %p80 = scmp.eq.s32.totalorder %s21, 1
      %p81 = por %p79, %p80
      %p82 = scmp.ne.s32.totalorder %s73, %s74
      %p83 = scmp.eq.s32.totalorder %s21, 0
      %p84 = por %p82, %p83
      %p85 = scmp.ne.s32.totalorder %s73, %s74
      %p86 = scmp.eq.s32.totalorder %s22, 1
      %p87 = por %p85, %p86
      %p89 = scmp.ne.s32.totalorder %s74, %s88
      %p90 = scmp.eq.s32.totalorder %s22, 0
      %p91 = por %p89, %p90
      %s92 = ssub.s32 %s16, %s23
      %p93 = scmp.eq.s32.totalorder %s92, 0
      %s95 = sadd.s32 %s94, 1
      %s96 = scalar_select %p93, %s94, %s95
      %p99 = pneg %p93
      %p100 = scmp.eq.s32.totalorder %s16, 1
      %p101 = por %p99, %p100
      %p102 = scmp.ne.s32.totalorder %s94, %s97
      %p103 = scmp.eq.s32.totalorder %s16, 0
      %p104 = por %p102, %p103
      %p105 = scmp.ne.s32.totalorder %s94, %s97
      %p106 = scmp.eq.s32.totalorder %s21, 1
      %p107 = por %p105, %p106
      %p108 = scmp.ne.s32.totalorder %s97, %s98
      %p109 = scmp.eq.s32.totalorder %s21, 0
      %p110 = por %p108, %p109
      %p111 = scmp.ne.s32.totalorder %s97, %s98
      %p112 = scmp.eq.s32.totalorder %s22, 1
      %p113 = por %p111, %p112
      %p115 = scmp.ne.s32.totalorder %s98, %s114
      %p116 = scmp.eq.s32.totalorder %s22, 0
      %p117 = por %p115, %p116
      %p118 = scmp.le.s32.totalorder 1, %s16
      %p119 = scmp.lt.s32.totalorder %s16, 3
      %p120 = pnand %p118, %p119
      %p121 = pneg %p120
      // Predicated region
      $region9: #{keygen_forward.1} parent=5 // pred_check
        _
      $region10: #{keygen_forward.1} parent=5 // pred_check_branch
        %123 = sbr.rel (%p120) target = $region12
      $region11: #{keygen_forward.1} parent=5 // pred_region
        %s124 = ssub.s32 %s16, 1
        // Predicated region
        $region13: #{keygen_forward.1} parent=11 // pred_check
          %p125 = pneg %p63
        $region14: #{keygen_forward.1} parent=11 // pred_check_branch
          %127 = sbr.rel (%p125) target = $region16
        $region15: #{keygen_forward.1} parent=11 // pred_region
          %s129 = ssub.s32 4096, 4096
          %130 = vsyncadd [#allocation6], %s129
          %s131 = sshll.u32 [#allocation5], 4
          %s132 = int_to_ptr.vmem [resolvable:$true] %s131
          %137 = dma.hbm_to_vmem [thread:$0]  %s1, 4096, %s132, [#allocation6], 128, 128, 8
        $region16: #{keygen_forward.1} parent=11 // pred_fallthru
          _
        // Predicated region
        $region17: #{keygen_forward.1} parent=11 // pred_check
          %p138 = pneg %p84
        $region18: #{keygen_forward.1} parent=11 // pred_check_branch
          %140 = sbr.rel (%p138) target = $region20
        $region19: #{keygen_forward.1} parent=11 // pred_region
          _
        $region20: #{keygen_forward.1} parent=11 // pred_fallthru
          _
      $region12: #{keygen_forward.1} parent=5 // pred_fallthru
        _
      %p141 = scmp.lt.s32.totalorder %s16, 2
      // Predicated region
      $region21: #{keygen_forward.1} parent=5 // pred_check
        %p142 = pneg %p141
      $region22: #{keygen_forward.1} parent=5 // pred_check_branch
        %144 = sbr.rel (%p142) target = $region24
      $region23: #{keygen_forward.1} parent=5 // pred_region
        // Predicated region
        $region25: #{keygen_forward.1} parent=23 // pred_check
          %p145 = pneg %p36
        $region26: #{keygen_forward.1} parent=23 // pred_check_branch
          %147 = sbr.rel (%p145) target = $region28
        $region27: #{keygen_forward.1} parent=23 // pred_region
          %s148 = sand.u32 %s26, 1
          %s149 = scalar_lea.sflag [#allocation3], %s148
          %s150 = sand.u32 %s26, 1
          %s151 = smul.addr %s150, 512
          %s152 = scalar_lea.vmem [#allocation2], %s151
          %s153 = smul.u32 32, %s16
          %s155 = ssub.s32 8192, 8192
          %156 = vsyncadd %s149, %s155
          %s157 = smul.addr %s153, 2
          %s158 = smul.addr %s157, 128
          %s159 = scalar_lea.hbm %s0, %s158
          %s160 = sshll.u32 %s152, 4
          %s161 = int_to_ptr.vmem [resolvable:$true] %s160
          %166 = dma.hbm_to_vmem [thread:$0]  %s159, 8192, %s161, %s149, 256, 256, 16
        $region28: #{keygen_forward.1} parent=23 // pred_fallthru
          _
      $region24: #{keygen_forward.1} parent=5 // pred_fallthru
        _
      %p167 = scmp.le.s32.totalorder 1, %s16
      %p168 = scmp.lt.s32.totalorder %s16, 3
      %p169 = pnand %p167, %p168
      %p170 = pneg %p169
      // Predicated region
      $region29: #{keygen_forward.1} parent=5 // pred_check
        _
      $region30: #{keygen_forward.1} parent=5 // pred_check_branch
        %172 = sbr.rel (%p169) target = $region32
      $region31: #{keygen_forward.1} parent=5 // pred_region
        %s173 = ssub.s32 %s16, 1
        %s174 = sand.u32 %s29, 1
        %s175 = scalar_lea.sflag [#allocation3], %s174
        %s176 = sand.u32 %s29, 1
        %s177 = smul.addr %s176, 512
        %s178 = scalar_lea.vmem [#allocation2], %s177
        // Predicated region
        $region33: #{keygen_forward.1} parent=31 // pred_check
          %p179 = pneg %p42
        $region34: #{keygen_forward.1} parent=31 // pred_check_branch
          %181 = sbr.rel (%p179) target = $region36
        $region35: #{keygen_forward.1} parent=31 // pred_region
          %182 = dma.done %s175, 8192
        $region36: #{keygen_forward.1} parent=31 // pred_fallthru
          _
        // Predicated region
        $region37: #{keygen_forward.1} parent=31 // pred_check
          %p183 = pneg %p63
        $region38: #{keygen_forward.1} parent=31 // pred_check_branch
          %185 = sbr.rel (%p183) target = $region40
        $region39: #{keygen_forward.1} parent=31 // pred_region
          %186 = dma.done [#allocation6], 4096
        $region40: #{keygen_forward.1} parent=31 // pred_fallthru
          _
        %s187 = sand.u32 %s29, 1
        %s188 = scalar_lea.sflag [#allocation3], %s187
        %s189 = sand.u32 %s29, 1
        %s190 = smul.addr %s189, 512
        %s191 = scalar_lea.vmem [#allocation2], %s190
        %p192 = pneg %p42
        %p193 = pneg %p39
        %p194 = pneg %p63
        %p195 = pneg %p60
        %p196 = pneg %p84
        %p197 = pneg %p81
        %p198 = pneg %p110
        %p199 = pneg %p107
        %s200 = sand.u32 %s97, 1
        %s201 = scalar_lea.sflag [#allocation4], %s200
        %s202 = sand.u32 %s97, 1
        %s203 = smul.addr %s202, 256
        %s204 = scalar_lea.vmem [#allocation7], %s203
        %s205 = smul.u32 32, %s21
        %s206 = smul.u32 32, %s21
        %v207 = vld [vmem:[%s178] sm:$0xff]
        %v208 = vld [vmem:[%s178 + $0x8] sm:$0xff]
        %v209 = vld [vmem:[%s178 + $0x10] sm:$0xff]
        %v210 = vld [vmem:[%s178 + $0x18] sm:$0xff]
        %v211 = vld [vmem:[%s178 + $0x20] sm:$0xff]
        %v212 = vld [vmem:[%s178 + $0x28] sm:$0xff]
        %v213 = vld [vmem:[%s178 + $0x30] sm:$0xff]
        %v214 = vld [vmem:[%s178 + $0x38] sm:$0xff]
        %v215 = vld [vmem:[%s178 + $0x40] sm:$0xff]
        %v216 = vld [vmem:[%s178 + $0x48] sm:$0xff]
        %v217 = vld [vmem:[%s178 + $0x50] sm:$0xff]
        %v218 = vld [vmem:[%s178 + $0x58] sm:$0xff]
        %v219 = vld [vmem:[%s178 + $0x60] sm:$0xff]
        %v220 = vld [vmem:[%s178 + $0x68] sm:$0xff]
        %v221 = vld [vmem:[%s178 + $0x70] sm:$0xff]
        %v222 = vld [vmem:[%s178 + $0x78] sm:$0xff]
        %v223 = vld [vmem:[%s178 + $0x80] sm:$0xff]
        %v224 = vld [vmem:[%s178 + $0x88] sm:$0xff]
        %v225 = vld [vmem:[%s178 + $0x90] sm:$0xff]
        %v226 = vld [vmem:[%s178 + $0x98] sm:$0xff]
        %v227 = vld [vmem:[%s178 + $0xa0] sm:$0xff]
        %v228 = vld [vmem:[%s178 + $0xa8] sm:$0xff]
        %v229 = vld [vmem:[%s178 + $0xb0] sm:$0xff]
        %v230 = vld [vmem:[%s178 + $0xb8] sm:$0xff]
        %v231 = vld [vmem:[%s178 + $0xc0] sm:$0xff]
        %v232 = vld [vmem:[%s178 + $0xc8] sm:$0xff]
        %v233 = vld [vmem:[%s178 + $0xd0] sm:$0xff]
        %v234 = vld [vmem:[%s178 + $0xd8] sm:$0xff]
        %v235 = vld [vmem:[%s178 + $0xe0] sm:$0xff]
        %v236 = vld [vmem:[%s178 + $0xe8] sm:$0xff]
        %v237 = vld [vmem:[%s178 + $0xf0] sm:$0xff]
        %v238 = vld [vmem:[%s178 + $0xf8] sm:$0xff]
        %v239 = vld [vmem:[%s178 + $0x100] sm:$0xff]
        %v240 = vld [vmem:[%s178 + $0x108] sm:$0xff]
        %v241 = vld [vmem:[%s178 + $0x110] sm:$0xff]
        %v242 = vld [vmem:[%s178 + $0x118] sm:$0xff]
        %v243 = vld [vmem:[%s178 + $0x120] sm:$0xff]
        %v244 = vld [vmem:[%s178 + $0x128] sm:$0xff]
        %v245 = vld [vmem:[%s178 + $0x130] sm:$0xff]
        %v246 = vld [vmem:[%s178 + $0x138] sm:$0xff]
        %v247 = vld [vmem:[%s178 + $0x140] sm:$0xff]
        %v248 = vld [vmem:[%s178 + $0x148] sm:$0xff]
        %v249 = vld [vmem:[%s178 + $0x150] sm:$0xff]
        %v250 = vld [vmem:[%s178 + $0x158] sm:$0xff]
        %v251 = vld [vmem:[%s178 + $0x160] sm:$0xff]
        %v252 = vld [vmem:[%s178 + $0x168] sm:$0xff]
        %v253 = vld [vmem:[%s178 + $0x170] sm:$0xff]
        %v254 = vld [vmem:[%s178 + $0x178] sm:$0xff]
        %v255 = vld [vmem:[%s178 + $0x180] sm:$0xff]
        %v256 = vld [vmem:[%s178 + $0x188] sm:$0xff]
        %v257 = vld [vmem:[%s178 + $0x190] sm:$0xff]
        %v258 = vld [vmem:[%s178 + $0x198] sm:$0xff]
        %v259 = vld [vmem:[%s178 + $0x1a0] sm:$0xff]
        %v260 = vld [vmem:[%s178 + $0x1a8] sm:$0xff]
        %v261 = vld [vmem:[%s178 + $0x1b0] sm:$0xff]
        %v262 = vld [vmem:[%s178 + $0x1b8] sm:$0xff]
        %v263 = vld [vmem:[%s178 + $0x1c0] sm:$0xff]
        %v264 = vld [vmem:[%s178 + $0x1c8] sm:$0xff]
        %v265 = vld [vmem:[%s178 + $0x1d0] sm:$0xff]
        %v266 = vld [vmem:[%s178 + $0x1d8] sm:$0xff]
        %v267 = vld [vmem:[%s178 + $0x1e0] sm:$0xff]
        %v268 = vld [vmem:[%s178 + $0x1e8] sm:$0xff]
        %v269 = vld [vmem:[%s178 + $0x1f0] sm:$0xff]
        %v270 = vld [vmem:[%s178 + $0x1f8] sm:$0xff]
        %v271 = vpack.c.bf16 %v209, %v207
        %v272 = vpack.c.bf16 %v210, %v208
        %v273 = vpack.c.bf16 %v213, %v211
        %v274 = vpack.c.bf16 %v214, %v212
        %v275 = vpack.c.bf16 %v217, %v215
        %v276 = vpack.c.bf16 %v218, %v216
        %v277 = vpack.c.bf16 %v221, %v219
        %v278 = vpack.c.bf16 %v222, %v220
        %v279 = vpack.c.bf16 %v225, %v223
        %v280 = vpack.c.bf16 %v226, %v224
        %v281 = vpack.c.bf16 %v229, %v227
        %v282 = vpack.c.bf16 %v230, %v228
        %v283 = vpack.c.bf16 %v233, %v231
        %v284 = vpack.c.bf16 %v234, %v232
        %v285 = vpack.c.bf16 %v237, %v235
        %v286 = vpack.c.bf16 %v238, %v236
        %v287 = vpack.c.bf16 %v241, %v239
        %v288 = vpack.c.bf16 %v242, %v240
        %v289 = vpack.c.bf16 %v245, %v243
        %v290 = vpack.c.bf16 %v246, %v244
        %v291 = vpack.c.bf16 %v249, %v247
        %v292 = vpack.c.bf16 %v250, %v248
        %v293 = vpack.c.bf16 %v253, %v251
        %v294 = vpack.c.bf16 %v254, %v252
        %v295 = vpack.c.bf16 %v257, %v255
        %v296 = vpack.c.bf16 %v258, %v256
        %v297 = vpack.c.bf16 %v261, %v259
        %v298 = vpack.c.bf16 %v262, %v260
        %v299 = vpack.c.bf16 %v265, %v263
        %v300 = vpack.c.bf16 %v266, %v264
        %v301 = vpack.c.bf16 %v269, %v267
        %v302 = vpack.c.bf16 %v270, %v268
        %v303 = vld [vmem:[#allocation5] sm:$0xff]
        %v304 = vld [vmem:[#allocation5 + $0x8] sm:$0xff]
        %v305 = vld [vmem:[#allocation5 + $0x10] sm:$0xff]
        %v306 = vld [vmem:[#allocation5 + $0x18] sm:$0xff]
        %v307 = vld [vmem:[#allocation5 + $0x20] sm:$0xff]
        %v308 = vld [vmem:[#allocation5 + $0x28] sm:$0xff]
        %v309 = vld [vmem:[#allocation5 + $0x30] sm:$0xff]
        %v310 = vld [vmem:[#allocation5 + $0x38] sm:$0xff]
        %v311 = vld [vmem:[#allocation5 + $0x40] sm:$0xff]
        %v312 = vld [vmem:[#allocation5 + $0x48] sm:$0xff]
        %v313 = vld [vmem:[#allocation5 + $0x50] sm:$0xff]
        %v314 = vld [vmem:[#allocation5 + $0x58] sm:$0xff]
        %v315 = vld [vmem:[#allocation5 + $0x60] sm:$0xff]
        %v316 = vld [vmem:[#allocation5 + $0x68] sm:$0xff]
        %v317 = vld [vmem:[#allocation5 + $0x70] sm:$0xff]
        %v318 = vld [vmem:[#allocation5 + $0x78] sm:$0xff]
        %v319 = vld [vmem:[#allocation5 + $0x80] sm:$0xff]
        %v320 = vld [vmem:[#allocation5 + $0x88] sm:$0xff]
        %v321 = vld [vmem:[#allocation5 + $0x90] sm:$0xff]
        %v322 = vld [vmem:[#allocation5 + $0x98] sm:$0xff]
        %v323 = vld [vmem:[#allocation5 + $0xa0] sm:$0xff]
        %v324 = vld [vmem:[#allocation5 + $0xa8] sm:$0xff]
        %v325 = vld [vmem:[#allocation5 + $0xb0] sm:$0xff]
        %v326 = vld [vmem:[#allocation5 + $0xb8] sm:$0xff]
        %v327 = vld [vmem:[#allocation5 + $0xc0] sm:$0xff]
        %v328 = vld [vmem:[#allocation5 + $0xc8] sm:$0xff]
        %v329 = vld [vmem:[#allocation5 + $0xd0] sm:$0xff]
        %v330 = vld [vmem:[#allocation5 + $0xd8] sm:$0xff]
        %v331 = vld [vmem:[#allocation5 + $0xe0] sm:$0xff]
        %v332 = vld [vmem:[#allocation5 + $0xe8] sm:$0xff]
        %v333 = vld [vmem:[#allocation5 + $0xf0] sm:$0xff]
        %v334 = vld [vmem:[#allocation5 + $0xf8] sm:$0xff]
        %v335 = vld [vmem:[%s2] sm:$0x3]
        %v337 = vlaneseq
        %v338 = vshrl.u32 %v337, 7
        %v339 = vsub.s32 0, %v338
        %v340 = vrot.slane %v335, %v339
        %v341 = vlaneseq
        %v342 = vshrl.u32 %v341, 7
        %v343 = vsub.s32 1, %v342
        %v344 = vrot.slane %v335, %v343
        %v379 = vunpack.c.l.b16 %v303
        %v380 = vunpack.c.h.b16 %v303
        %v381 = vunpack.c.l.b16 %v304
        %v382 = vunpack.c.h.b16 %v304
        %v383 = vunpack.c.l.b16 %v305
        %v384 = vunpack.c.h.b16 %v305
        %v385 = vunpack.c.l.b16 %v306
        %v386 = vunpack.c.h.b16 %v306
        %v387 = vunpack.c.l.b16 %v307
        %v388 = vunpack.c.h.b16 %v307
        %v389 = vunpack.c.l.b16 %v308
        %v390 = vunpack.c.h.b16 %v308
        %v391 = vunpack.c.l.b16 %v309
        %v392 = vunpack.c.h.b16 %v309
        %v393 = vunpack.c.l.b16 %v310
        %v394 = vunpack.c.h.b16 %v310
        %v395 = vunpack.c.l.b16 %v311
        %v396 = vunpack.c.h.b16 %v311
        %v397 = vunpack.c.l.b16 %v312
        %v398 = vunpack.c.h.b16 %v312
        %v399 = vunpack.c.l.b16 %v313
        %v400 = vunpack.c.h.b16 %v313
        %v401 = vunpack.c.l.b16 %v314
        %v402 = vunpack.c.h.b16 %v314
        %v403 = vunpack.c.l.b16 %v315
        %v404 = vunpack.c.h.b16 %v315
        %v405 = vunpack.c.l.b16 %v316
        %v406 = vunpack.c.h.b16 %v316
        %v407 = vunpack.c.l.b16 %v317
        %v408 = vunpack.c.h.b16 %v317
        %v409 = vunpack.c.l.b16 %v318
        %v410 = vunpack.c.h.b16 %v318
        %v411 = vunpack.c.l.b16 %v319
        %v412 = vunpack.c.h.b16 %v319
        %v413 = vunpack.c.l.b16 %v320
        %v414 = vunpack.c.h.b16 %v320
        %v415 = vunpack.c.l.b16 %v321
        %v416 = vunpack.c.h.b16 %v321
        %v417 = vunpack.c.l.b16 %v322
        %v418 = vunpack.c.h.b16 %v322
        %v419 = vunpack.c.l.b16 %v323
        %v420 = vunpack.c.h.b16 %v323
        %v421 = vunpack.c.l.b16 %v324
        %v422 = vunpack.c.h.b16 %v324
        %v423 = vunpack.c.l.b16 %v325
        %v424 = vunpack.c.h.b16 %v325
        %v425 = vunpack.c.l.b16 %v326
        %v426 = vunpack.c.h.b16 %v326
        %v427 = vunpack.c.l.b16 %v327
        %v428 = vunpack.c.h.b16 %v327
        %v429 = vunpack.c.l.b16 %v328
        %v430 = vunpack.c.h.b16 %v328
        %v431 = vunpack.c.l.b16 %v329
        %v432 = vunpack.c.h.b16 %v329
        %v433 = vunpack.c.l.b16 %v330
        %v434 = vunpack.c.h.b16 %v330
        %v435 = vunpack.c.l.b16 %v331
        %v436 = vunpack.c.h.b16 %v331
        %v437 = vunpack.c.l.b16 %v332
        %v438 = vunpack.c.h.b16 %v332
        %v439 = vunpack.c.l.b16 %v333
        %v440 = vunpack.c.h.b16 %v333
        %v441 = vunpack.c.l.b16 %v334
        %v442 = vunpack.c.h.b16 %v334
        %v443 = vpack.c.b16 %v381, %v379
        %v444 = vpack.c.b16 %v382, %v380
        %v445 = vpack.c.b16 %v385, %v383
        %v446 = vpack.c.b16 %v386, %v384
        %v447 = vpack.c.b16 %v389, %v387
        %v448 = vpack.c.b16 %v390, %v388
        %v449 = vpack.c.b16 %v393, %v391
        %v450 = vpack.c.b16 %v394, %v392
        %v451 = vpack.c.b16 %v397, %v395
        %v452 = vpack.c.b16 %v398, %v396
        %v453 = vpack.c.b16 %v401, %v399
        %v454 = vpack.c.b16 %v402, %v400
        %v455 = vpack.c.b16 %v405, %v403
        %v456 = vpack.c.b16 %v406, %v404
        %v457 = vpack.c.b16 %v409, %v407
        %v458 = vpack.c.b16 %v410, %v408
        %v459 = vpack.c.b16 %v413, %v411
        %v460 = vpack.c.b16 %v414, %v412
        %v461 = vpack.c.b16 %v417, %v415
        %v462 = vpack.c.b16 %v418, %v416
        %v463 = vpack.c.b16 %v421, %v419
        %v464 = vpack.c.b16 %v422, %v420
        %v465 = vpack.c.b16 %v425, %v423
        %v466 = vpack.c.b16 %v426, %v424
        %v467 = vpack.c.b16 %v429, %v427
        %v468 = vpack.c.b16 %v430, %v428
        %v469 = vpack.c.b16 %v433, %v431
        %v470 = vpack.c.b16 %v434, %v432
        %v471 = vpack.c.b16 %v437, %v435
        %v472 = vpack.c.b16 %v438, %v436
        %v473 = vpack.c.b16 %v441, %v439
        %v474 = vpack.c.b16 %v442, %v440
        %507 = vmatprep.subr.bf16.mxu0 %v444
        %508 = vmatpush1.bf16.msra.mxu0 %v443
        %509 = vmatprep.subr.bf16.mxu0 %v446
        %510 = vmatpush1.bf16.msra.mxu0 %v445
        %511 = vmatprep.subr.bf16.mxu0 %v448
        %512 = vmatpush1.bf16.msra.mxu0 %v447
        %513 = vmatprep.subr.bf16.mxu0 %v450
        %514 = vmatpush1.bf16.msra.mxu0 %v449
        %515 = vmatprep.subr.bf16.mxu0 %v452
        %516 = vmatpush1.bf16.msra.mxu0 %v451
        %517 = vmatprep.subr.bf16.mxu0 %v454
        %518 = vmatpush1.bf16.msra.mxu0 %v453
        %519 = vmatprep.subr.bf16.mxu0 %v456
        %520 = vmatpush1.bf16.msra.mxu0 %v455
        %521 = vmatprep.subr.bf16.mxu0 %v458
        %522 = vmatpush1.bf16.msra.mxu0 %v457
        %523 = vmatprep.subr.bf16.mxu0 %v460
        %524 = vmatpush1.bf16.msra.mxu0 %v459
        %525 = vmatprep.subr.bf16.mxu0 %v462
        %526 = vmatpush1.bf16.msra.mxu0 %v461
        %527 = vmatprep.subr.bf16.mxu0 %v464
        %528 = vmatpush1.bf16.msra.mxu0 %v463
        %529 = vmatprep.subr.bf16.mxu0 %v466
        %530 = vmatpush1.bf16.msra.mxu0 %v465
        %531 = vmatprep.subr.bf16.mxu0 %v468
        %532 = vmatpush1.bf16.msra.mxu0 %v467
        %533 = vmatprep.subr.bf16.mxu0 %v470
        %534 = vmatpush1.bf16.msra.mxu0 %v469
        %535 = vmatprep.subr.bf16.mxu0 %v472
        %536 = vmatpush1.bf16.msra.mxu0 %v471
        %537 = vmatprep.subr.bf16.mxu0 %v474
        %538 = vmatpush1.bf16.msra.mxu0 %v473
        %539 = vmatprep.mubr.bf16.mxu0 %v272
        %540 = vmatmul.mubr.bf16.gmra.mrb[0].mxu0 %v271
        %v541 = vpop.f32.mrb[0].mxu0
        %v542 = vadd.f32 %v340, %v541
        %v543 = vpop.f32.mrb[0].mxu0
        %v544 = vadd.f32 %v344, %v543
        %v545 = vpop.f32.mrb[0].mxu0
        %v546 = vadd.f32 %v340, %v545
        %v547 = vpop.f32.mrb[0].mxu0
        %v548 = vadd.f32 %v344, %v547
        %549 = vmatprep.mubr.bf16.mxu0 %v274
        %550 = vmatmul.mubr.bf16.gmra.mrb[0].mxu0 %v273
        %v551 = vpop.f32.mrb[0].mxu0
        %v552 = vadd.f32 %v340, %v551
        %v553 = vpop.f32.mrb[0].mxu0
        %v554 = vadd.f32 %v344, %v553
        %v555 = vpop.f32.mrb[0].mxu0
        %v556 = vadd.f32 %v340, %v555
        %v557 = vpop.f32.mrb[0].mxu0
        %v558 = vadd.f32 %v344, %v557
        %559 = vmatprep.mubr.bf16.mxu0 %v276
        %560 = vmatmul.mubr.bf16.gmra.mrb[0].mxu0 %v275
        %v561 = vpop.f32.mrb[0].mxu0
        %v562 = vadd.f32 %v340, %v561
        %v563 = vpop.f32.mrb[0].mxu0
        %v564 = vadd.f32 %v344, %v563
        %v565 = vpop.f32.mrb[0].mxu0
        %v566 = vadd.f32 %v340, %v565
        %v567 = vpop.f32.mrb[0].mxu0
        %v568 = vadd.f32 %v344, %v567
        %569 = vmatprep.mubr.bf16.mxu0 %v278
        %570 = vmatmul.mubr.bf16.gmra.mrb[0].mxu0 %v277
        %v571 = vpop.f32.mrb[0].mxu0
        %v572 = vadd.f32 %v340, %v571
        %v573 = vpop.f32.mrb[0].mxu0
        %v574 = vadd.f32 %v344, %v573
        %v575 = vpop.f32.mrb[0].mxu0
        %v576 = vadd.f32 %v340, %v575
        %v577 = vpop.f32.mrb[0].mxu0
        %v578 = vadd.f32 %v344, %v577
        %579 = vmatprep.mubr.bf16.mxu0 %v280
        %580 = vmatmul.mubr.bf16.gmra.mrb[0].mxu0 %v279
        %v581 = vpop.f32.mrb[0].mxu0
        %v582 = vadd.f32 %v340, %v581
        %v583 = vpop.f32.mrb[0].mxu0
        %v584 = vadd.f32 %v344, %v583
        %v585 = vpop.f32.mrb[0].mxu0
        %v586 = vadd.f32 %v340, %v585
        %v587 = vpop.f32.mrb[0].mxu0
        %v588 = vadd.f32 %v344, %v587
        %589 = vmatprep.mubr.bf16.mxu0 %v282
        %590 = vmatmul.mubr.bf16.gmra.mrb[0].mxu0 %v281
        %v591 = vpop.f32.mrb[0].mxu0
        %v592 = vadd.f32 %v340, %v591
        %v593 = vpop.f32.mrb[0].mxu0
        %v594 = vadd.f32 %v344, %v593
        %v595 = vpop.f32.mrb[0].mxu0
        %v596 = vadd.f32 %v340, %v595
        %v597 = vpop.f32.mrb[0].mxu0
        %v598 = vadd.f32 %v344, %v597
        %599 = vmatprep.mubr.bf16.mxu0 %v284
        %600 = vmatmul.mubr.bf16.gmra.mrb[0].mxu0 %v283
        %v601 = vpop.f32.mrb[0].mxu0
        %v602 = vadd.f32 %v340, %v601
        %v603 = vpop.f32.mrb[0].mxu0
        %v604 = vadd.f32 %v344, %v603
        %v605 = vpop.f32.mrb[0].mxu0
        %v606 = vadd.f32 %v340, %v605
        %v607 = vpop.f32.mrb[0].mxu0
        %v608 = vadd.f32 %v344, %v607
        %609 = vmatprep.mubr.bf16.mxu0 %v286
        %610 = vmatmul.mubr.bf16.gmra.mrb[0].mxu0 %v285
        %v611 = vpop.f32.mrb[0].mxu0
        %v612 = vadd.f32 %v340, %v611
        %v613 = vpop.f32.mrb[0].mxu0
        %v614 = vadd.f32 %v344, %v613
        %v615 = vpop.f32.mrb[0].mxu0
        %v616 = vadd.f32 %v340, %v615
        %v617 = vpop.f32.mrb[0].mxu0
        %v618 = vadd.f32 %v344, %v617
        %619 = vmatprep.mubr.bf16.mxu0 %v288
        %620 = vmatmul.mubr.bf16.gmra.mrb[0].mxu0 %v287
        %v621 = vpop.f32.mrb[0].mxu0
        %v622 = vadd.f32 %v340, %v621
        %v623 = vpop.f32.mrb[0].mxu0
        %v624 = vadd.f32 %v344, %v623
        %v625 = vpop.f32.mrb[0].mxu0
        %v626 = vadd.f32 %v340, %v625
        %v627 = vpop.f32.mrb[0].mxu0
        %v628 = vadd.f32 %v344, %v627
        %629 = vmatprep.mubr.bf16.mxu0 %v290
        %630 = vmatmul.mubr.bf16.gmra.mrb[0].mxu0 %v289
        %v631 = vpop.f32.mrb[0].mxu0
        %v632 = vadd.f32 %v340, %v631
        %v633 = vpop.f32.mrb[0].mxu0
        %v634 = vadd.f32 %v344, %v633
        %v635 = vpop.f32.mrb[0].mxu0
        %v636 = vadd.f32 %v340, %v635
        %v637 = vpop.f32.mrb[0].mxu0
        %v638 = vadd.f32 %v344, %v637
        %639 = vmatprep.mubr.bf16.mxu0 %v292
        %640 = vmatmul.mubr.bf16.gmra.mrb[0].mxu0 %v291
        %v641 = vpop.f32.mrb[0].mxu0
        %v642 = vadd.f32 %v340, %v641
        %v643 = vpop.f32.mrb[0].mxu0
        %v644 = vadd.f32 %v344, %v643
        %v645 = vpop.f32.mrb[0].mxu0
        %v646 = vadd.f32 %v340, %v645
        %v647 = vpop.f32.mrb[0].mxu0
        %v648 = vadd.f32 %v344, %v647
        %649 = vmatprep.mubr.bf16.mxu0 %v294
        %650 = vmatmul.mubr.bf16.gmra.mrb[0].mxu0 %v293
        %v651 = vpop.f32.mrb[0].mxu0
        %v652 = vadd.f32 %v340, %v651
        %v653 = vpop.f32.mrb[0].mxu0
        %v654 = vadd.f32 %v344, %v653
        %v655 = vpop.f32.mrb[0].mxu0
        %v656 = vadd.f32 %v340, %v655
        %v657 = vpop.f32.mrb[0].mxu0
        %v658 = vadd.f32 %v344, %v657
        %659 = vmatprep.mubr.bf16.mxu0 %v296
        %660 = vmatmul.mubr.bf16.gmra.mrb[0].mxu0 %v295
        %v661 = vpop.f32.mrb[0].mxu0
        %v662 = vadd.f32 %v340, %v661
        %v663 = vpop.f32.mrb[0].mxu0
        %v664 = vadd.f32 %v344, %v663
        %v665 = vpop.f32.mrb[0].mxu0
        %v666 = vadd.f32 %v340, %v665
        %v667 = vpop.f32.mrb[0].mxu0
        %v668 = vadd.f32 %v344, %v667
        %669 = vmatprep.mubr.bf16.mxu0 %v298
        %670 = vmatmul.mubr.bf16.gmra.mrb[0].mxu0 %v297
        %v671 = vpop.f32.mrb[0].mxu0
        %v672 = vadd.f32 %v340, %v671
        %v673 = vpop.f32.mrb[0].mxu0
        %v674 = vadd.f32 %v344, %v673
        %v675 = vpop.f32.mrb[0].mxu0
        %v676 = vadd.f32 %v340, %v675
        %v677 = vpop.f32.mrb[0].mxu0
        %v678 = vadd.f32 %v344, %v677
        %679 = vmatprep.mubr.bf16.mxu0 %v300
        %680 = vmatmul.mubr.bf16.gmra.mrb[0].mxu0 %v299
        %v681 = vpop.f32.mrb[0].mxu0
        %v682 = vadd.f32 %v340, %v681
        %v683 = vpop.f32.mrb[0].mxu0
        %v684 = vadd.f32 %v344, %v683
        %v685 = vpop.f32.mrb[0].mxu0
        %v686 = vadd.f32 %v340, %v685
        %v687 = vpop.f32.mrb[0].mxu0
        %v688 = vadd.f32 %v344, %v687
        %689 = vmatprep.mubr.bf16.mxu0 %v302
        %690 = vmatmul.mubr.bf16.gmra.mrb[0].mxu0 %v301
        %v691 = vpop.f32.mrb[0].mxu0
        %v692 = vadd.f32 %v340, %v691
        %v693 = vpop.f32.mrb[0].mxu0
        %v694 = vadd.f32 %v344, %v693
        %v695 = vpop.f32.mrb[0].mxu0
        %v696 = vadd.f32 %v340, %v695
        %v697 = vpop.f32.mrb[0].mxu0
        %v698 = vadd.f32 %v344, %v697
        %699 = vdwg.mxu0
        %v700 = vmul.f32 %v542, 0.5
        %v701 = vmul.f32 %v544, 0.5
        %v702 = vmul.f32 %v546, 0.5
        %v703 = vmul.f32 %v548, 0.5
        %v704 = vmul.f32 %v552, 0.5
        %v705 = vmul.f32 %v554, 0.5
        %v706 = vmul.f32 %v556, 0.5
        %v707 = vmul.f32 %v558, 0.5
        %v708 = vmul.f32 %v562, 0.5
        %v709 = vmul.f32 %v564, 0.5
        %v710 = vmul.f32 %v566, 0.5
        %v711 = vmul.f32 %v568, 0.5
        %v712 = vmul.f32 %v572, 0.5
        %v713 = vmul.f32 %v574, 0.5
        %v714 = vmul.f32 %v576, 0.5
        %v715 = vmul.f32 %v578, 0.5
        %v716 = vmul.f32 %v582, 0.5
        %v717 = vmul.f32 %v584, 0.5
        %v718 = vmul.f32 %v586, 0.5
        %v719 = vmul.f32 %v588, 0.5
        %v720 = vmul.f32 %v592, 0.5
        %v721 = vmul.f32 %v594, 0.5
        %v722 = vmul.f32 %v596, 0.5
        %v723 = vmul.f32 %v598, 0.5
        %v724 = vmul.f32 %v602, 0.5
        %v725 = vmul.f32 %v604, 0.5
        %v726 = vmul.f32 %v606, 0.5
        %v727 = vmul.f32 %v608, 0.5
        %v728 = vmul.f32 %v612, 0.5
        %v729 = vmul.f32 %v614, 0.5
        %v730 = vmul.f32 %v616, 0.5
        %v731 = vmul.f32 %v618, 0.5
        %v732 = vmul.f32 %v622, 0.5
        %v733 = vmul.f32 %v624, 0.5
        %v734 = vmul.f32 %v626, 0.5
        %v735 = vmul.f32 %v628, 0.5
        %v736 = vmul.f32 %v632, 0.5
        %v737 = vmul.f32 %v634, 0.5
        %v738 = vmul.f32 %v636, 0.5
        %v739 = vmul.f32 %v638, 0.5
        %v740 = vmul.f32 %v642, 0.5
        %v741 = vmul.f32 %v644, 0.5
        %v742 = vmul.f32 %v646, 0.5
        %v743 = vmul.f32 %v648, 0.5
        %v744 = vmul.f32 %v652, 0.5
        %v745 = vmul.f32 %v654, 0.5
        %v746 = vmul.f32 %v656, 0.5
        %v747 = vmul.f32 %v658, 0.5
        %v748 = vmul.f32 %v662, 0.5
        %v749 = vmul.f32 %v664, 0.5
        %v750 = vmul.f32 %v666, 0.5
        %v751 = vmul.f32 %v668, 0.5
        %v752 = vmul.f32 %v672, 0.5
        %v753 = vmul.f32 %v674, 0.5
        %v754 = vmul.f32 %v676, 0.5
        %v755 = vmul.f32 %v678, 0.5
        %v756 = vmul.f32 %v682, 0.5
        %v757 = vmul.f32 %v684, 0.5
        %v758 = vmul.f32 %v686, 0.5
        %v759 = vmul.f32 %v688, 0.5
        %v760 = vmul.f32 %v692, 0.5
        %v761 = vmul.f32 %v694, 0.5
        %v762 = vmul.f32 %v696, 0.5
        %v763 = vmul.f32 %v698, 0.5
        %v764 = vtanh.pop %v700
        %v765 = vtanh.pop %v701
        %v766 = vtanh.pop %v702
        %v767 = vtanh.pop %v703
        %v768 = vtanh.pop %v704
        %v769 = vtanh.pop %v705
        %v770 = vtanh.pop %v706
        %v771 = vtanh.pop %v707
        %v772 = vtanh.pop %v708
        %v773 = vtanh.pop %v709
        %v774 = vtanh.pop %v710
        %v775 = vtanh.pop %v711
        %v776 = vtanh.pop %v712
        %v777 = vtanh.pop %v713
        %v778 = vtanh.pop %v714
        %v779 = vtanh.pop %v715
        %v780 = vtanh.pop %v716
        %v781 = vtanh.pop %v717
        %v782 = vtanh.pop %v718
        %v783 = vtanh.pop %v719
        %v784 = vtanh.pop %v720
        %v785 = vtanh.pop %v721
        %v786 = vtanh.pop %v722
        %v787 = vtanh.pop %v723
        %v788 = vtanh.pop %v724
        %v789 = vtanh.pop %v725
        %v790 = vtanh.pop %v726
        %v791 = vtanh.pop %v727
        %v792 = vtanh.pop %v728
        %v793 = vtanh.pop %v729
        %v794 = vtanh.pop %v730
        %v795 = vtanh.pop %v731
        %v796 = vtanh.pop %v732
        %v797 = vtanh.pop %v733
        %v798 = vtanh.pop %v734
        %v799 = vtanh.pop %v735
        %v800 = vtanh.pop %v736
        %v801 = vtanh.pop %v737
        %v802 = vtanh.pop %v738
        %v803 = vtanh.pop %v739
        %v804 = vtanh.pop %v740
        %v805 = vtanh.pop %v741
        %v806 = vtanh.pop %v742
        %v807 = vtanh.pop %v743
        %v808 = vtanh.pop %v744
        %v809 = vtanh.pop %v745
        %v810 = vtanh.pop %v746
        %v811 = vtanh.pop %v747
        %v812 = vtanh.pop %v748
        %v813 = vtanh.pop %v749
        %v814 = vtanh.pop %v750
        %v815 = vtanh.pop %v751
        %v816 = vtanh.pop %v752
        %v817 = vtanh.pop %v753
        %v818 = vtanh.pop %v754
        %v819 = vtanh.pop %v755
        %v820 = vtanh.pop %v756
        %v821 = vtanh.pop %v757
        %v822 = vtanh.pop %v758
        %v823 = vtanh.pop %v759
        %v824 = vtanh.pop %v760
        %v825 = vtanh.pop %v761
        %v826 = vtanh.pop %v762
        %v827 = vtanh.pop %v763
        %v828 = vmul.f32 %v764, 0.5
        %v829 = vmul.f32 %v765, 0.5
        %v830 = vmul.f32 %v766, 0.5
        %v831 = vmul.f32 %v767, 0.5
        %v832 = vmul.f32 %v768, 0.5
        %v833 = vmul.f32 %v769, 0.5
        %v834 = vmul.f32 %v770, 0.5
        %v835 = vmul.f32 %v771, 0.5
        %v836 = vmul.f32 %v772, 0.5
        %v837 = vmul.f32 %v773, 0.5
        %v838 = vmul.f32 %v774, 0.5
        %v839 = vmul.f32 %v775, 0.5
        %v840 = vmul.f32 %v776, 0.5
        %v841 = vmul.f32 %v777, 0.5
        %v842 = vmul.f32 %v778, 0.5
        %v843 = vmul.f32 %v779, 0.5
        %v844 = vmul.f32 %v780, 0.5
        %v845 = vmul.f32 %v781, 0.5
        %v846 = vmul.f32 %v782, 0.5
        %v847 = vmul.f32 %v783, 0.5
        %v848 = vmul.f32 %v784, 0.5
        %v849 = vmul.f32 %v785, 0.5
        %v850 = vmul.f32 %v786, 0.5
        %v851 = vmul.f32 %v787, 0.5
        %v852 = vmul.f32 %v788, 0.5
        %v853 = vmul.f32 %v789, 0.5
        %v854 = vmul.f32 %v790, 0.5
        %v855 = vmul.f32 %v791, 0.5
        %v856 = vmul.f32 %v792, 0.5
        %v857 = vmul.f32 %v793, 0.5
        %v858 = vmul.f32 %v794, 0.5
        %v859 = vmul.f32 %v795, 0.5
        %v860 = vmul.f32 %v796, 0.5
        %v861 = vmul.f32 %v797, 0.5
        %v862 = vmul.f32 %v798, 0.5
        %v863 = vmul.f32 %v799, 0.5
        %v864 = vmul.f32 %v800, 0.5
        %v865 = vmul.f32 %v801, 0.5
        %v866 = vmul.f32 %v802, 0.5
        %v867 = vmul.f32 %v803, 0.5
        %v868 = vmul.f32 %v804, 0.5
        %v869 = vmul.f32 %v805, 0.5
        %v870 = vmul.f32 %v806, 0.5
        %v871 = vmul.f32 %v807, 0.5
        %v872 = vmul.f32 %v808, 0.5
        %v873 = vmul.f32 %v809, 0.5
        %v874 = vmul.f32 %v810, 0.5
        %v875 = vmul.f32 %v811, 0.5
        %v876 = vmul.f32 %v812, 0.5
        %v877 = vmul.f32 %v813, 0.5
        %v878 = vmul.f32 %v814, 0.5
        %v879 = vmul.f32 %v815, 0.5
        %v880 = vmul.f32 %v816, 0.5
        %v881 = vmul.f32 %v817, 0.5
        %v882 = vmul.f32 %v818, 0.5
        %v883 = vmul.f32 %v819, 0.5
        %v884 = vmul.f32 %v820, 0.5
        %v885 = vmul.f32 %v821, 0.5
        %v886 = vmul.f32 %v822, 0.5
        %v887 = vmul.f32 %v823, 0.5
        %v888 = vmul.f32 %v824, 0.5
        %v889 = vmul.f32 %v825, 0.5
        %v890 = vmul.f32 %v826, 0.5
        %v891 = vmul.f32 %v827, 0.5
        %v892 = vadd.f32 %v828, 0.5
        %v893 = vadd.f32 %v829, 0.5
        %v894 = vadd.f32 %v830, 0.5
        %v895 = vadd.f32 %v831, 0.5
        %v896 = vadd.f32 %v832, 0.5
        %v897 = vadd.f32 %v833, 0.5
        %v898 = vadd.f32 %v834, 0.5
        %v899 = vadd.f32 %v835, 0.5
        %v900 = vadd.f32 %v836, 0.5
        %v901 = vadd.f32 %v837, 0.5
        %v902 = vadd.f32 %v838, 0.5
        %v903 = vadd.f32 %v839, 0.5
        %v904 = vadd.f32 %v840, 0.5
        %v905 = vadd.f32 %v841, 0.5
        %v906 = vadd.f32 %v842, 0.5
        %v907 = vadd.f32 %v843, 0.5
        %v908 = vadd.f32 %v844, 0.5
        %v909 = vadd.f32 %v845, 0.5
        %v910 = vadd.f32 %v846, 0.5
        %v911 = vadd.f32 %v847, 0.5
        %v912 = vadd.f32 %v848, 0.5
        %v913 = vadd.f32 %v849, 0.5
        %v914 = vadd.f32 %v850, 0.5
        %v915 = vadd.f32 %v851, 0.5
        %v916 = vadd.f32 %v852, 0.5
        %v917 = vadd.f32 %v853, 0.5
        %v918 = vadd.f32 %v854, 0.5
        %v919 = vadd.f32 %v855, 0.5
        %v920 = vadd.f32 %v856, 0.5
        %v921 = vadd.f32 %v857, 0.5
        %v922 = vadd.f32 %v858, 0.5
        %v923 = vadd.f32 %v859, 0.5
        %v924 = vadd.f32 %v860, 0.5
        %v925 = vadd.f32 %v861, 0.5
        %v926 = vadd.f32 %v862, 0.5
        %v927 = vadd.f32 %v863, 0.5
        %v928 = vadd.f32 %v864, 0.5
        %v929 = vadd.f32 %v865, 0.5
        %v930 = vadd.f32 %v866, 0.5
        %v931 = vadd.f32 %v867, 0.5
        %v932 = vadd.f32 %v868, 0.5
        %v933 = vadd.f32 %v869, 0.5
        %v934 = vadd.f32 %v870, 0.5
        %v935 = vadd.f32 %v871, 0.5
        %v936 = vadd.f32 %v872, 0.5
        %v937 = vadd.f32 %v873, 0.5
        %v938 = vadd.f32 %v874, 0.5
        %v939 = vadd.f32 %v875, 0.5
        %v940 = vadd.f32 %v876, 0.5
        %v941 = vadd.f32 %v877, 0.5
        %v942 = vadd.f32 %v878, 0.5
        %v943 = vadd.f32 %v879, 0.5
        %v944 = vadd.f32 %v880, 0.5
        %v945 = vadd.f32 %v881, 0.5
        %v946 = vadd.f32 %v882, 0.5
        %v947 = vadd.f32 %v883, 0.5
        %v948 = vadd.f32 %v884, 0.5
        %v949 = vadd.f32 %v885, 0.5
        %v950 = vadd.f32 %v886, 0.5
        %v951 = vadd.f32 %v887, 0.5
        %v952 = vadd.f32 %v888, 0.5
        %v953 = vadd.f32 %v889, 0.5
        %v954 = vadd.f32 %v890, 0.5
        %v955 = vadd.f32 %v891, 0.5
        %v956 = vpack.c.bf16 %v894, %v892
        %v957 = vpack.c.bf16 %v895, %v893
        %v958 = vpack.c.bf16 %v898, %v896
        %v959 = vpack.c.bf16 %v899, %v897
        %v960 = vpack.c.bf16 %v902, %v900
        %v961 = vpack.c.bf16 %v903, %v901
        %v962 = vpack.c.bf16 %v906, %v904
        %v963 = vpack.c.bf16 %v907, %v905
        %v964 = vpack.c.bf16 %v910, %v908
        %v965 = vpack.c.bf16 %v911, %v909
        %v966 = vpack.c.bf16 %v914, %v912
        %v967 = vpack.c.bf16 %v915, %v913
        %v968 = vpack.c.bf16 %v918, %v916
        %v969 = vpack.c.bf16 %v919, %v917
        %v970 = vpack.c.bf16 %v922, %v920
        %v971 = vpack.c.bf16 %v923, %v921
        %v972 = vpack.c.bf16 %v926, %v924
        %v973 = vpack.c.bf16 %v927, %v925
        %v974 = vpack.c.bf16 %v930, %v928
        %v975 = vpack.c.bf16 %v931, %v929
        %v976 = vpack.c.bf16 %v934, %v932
        %v977 = vpack.c.bf16 %v935, %v933
        %v978 = vpack.c.bf16 %v938, %v936
        %v979 = vpack.c.bf16 %v939, %v937
        %v980 = vpack.c.bf16 %v942, %v940
        %v981 = vpack.c.bf16 %v943, %v941
        %v982 = vpack.c.bf16 %v946, %v944
        %v983 = vpack.c.bf16 %v947, %v945
        %v984 = vpack.c.bf16 %v950, %v948
        %v985 = vpack.c.bf16 %v951, %v949
        %v986 = vpack.c.bf16 %v954, %v952
        %v987 = vpack.c.bf16 %v955, %v953
        %v1020 = vunpack.c.l.b16 %v956
        %v1021 = vunpack.c.l.b16 %v957
        %v1022 = vunpack.c.h.b16 %v956
        %v1023 = vunpack.c.h.b16 %v957
        %v1024 = vunpack.c.l.b16 %v958
        %v1025 = vunpack.c.l.b16 %v959
        %v1026 = vunpack.c.h.b16 %v958
        %v1027 = vunpack.c.h.b16 %v959
        %v1028 = vunpack.c.l.b16 %v960
        %v1029 = vunpack.c.l.b16 %v961
        %v1030 = vunpack.c.h.b16 %v960
        %v1031 = vunpack.c.h.b16 %v961
        %v1032 = vunpack.c.l.b16 %v962
        %v1033 = vunpack.c.l.b16 %v963
        %v1034 = vunpack.c.h.b16 %v962
        %v1035 = vunpack.c.h.b16 %v963
        %v1036 = vunpack.c.l.b16 %v964
        %v1037 = vunpack.c.l.b16 %v965
        %v1038 = vunpack.c.h.b16 %v964
        %v1039 = vunpack.c.h.b16 %v965
        %v1040 = vunpack.c.l.b16 %v966
        %v1041 = vunpack.c.l.b16 %v967
        %v1042 = vunpack.c.h.b16 %v966
        %v1043 = vunpack.c.h.b16 %v967
        %v1044 = vunpack.c.l.b16 %v968
        %v1045 = vunpack.c.l.b16 %v969
        %v1046 = vunpack.c.h.b16 %v968
        %v1047 = vunpack.c.h.b16 %v969
        %v1048 = vunpack.c.l.b16 %v970
        %v1049 = vunpack.c.l.b16 %v971
        %v1050 = vunpack.c.h.b16 %v970
        %v1051 = vunpack.c.h.b16 %v971
        %v1052 = vunpack.c.l.b16 %v972
        %v1053 = vunpack.c.l.b16 %v973
        %v1054 = vunpack.c.h.b16 %v972
        %v1055 = vunpack.c.h.b16 %v973
        %v1056 = vunpack.c.l.b16 %v974
        %v1057 = vunpack.c.l.b16 %v975
        %v1058 = vunpack.c.h.b16 %v974
        %v1059 = vunpack.c.h.b16 %v975
        %v1060 = vunpack.c.l.b16 %v976
        %v1061 = vunpack.c.l.b16 %v977
        %v1062 = vunpack.c.h.b16 %v976
        %v1063 = vunpack.c.h.b16 %v977
        %v1064 = vunpack.c.l.b16 %v978
        %v1065 = vunpack.c.l.b16 %v979
        %v1066 = vunpack.c.h.b16 %v978
        %v1067 = vunpack.c.h.b16 %v979
        %v1068 = vunpack.c.l.b16 %v980
        %v1069 = vunpack.c.l.b16 %v981
        %v1070 = vunpack.c.h.b16 %v980
        %v1071 = vunpack.c.h.b16 %v981
        %v1072 = vunpack.c.l.b16 %v982
        %v1073 = vunpack.c.l.b16 %v983
        %v1074 = vunpack.c.h.b16 %v982
        %v1075 = vunpack.c.h.b16 %v983
        %v1076 = vunpack.c.l.b16 %v984
        %v1077 = vunpack.c.l.b16 %v985
        %v1078 = vunpack.c.h.b16 %v984
        %v1079 = vunpack.c.h.b16 %v985
        %v1080 = vunpack.c.l.b16 %v986
        %v1081 = vunpack.c.l.b16 %v987
        %v1082 = vunpack.c.h.b16 %v986
        %v1083 = vunpack.c.h.b16 %v987
        %v1084 = vpack.c.b16 %v1021, %v1020
        %v1085 = vpack.c.b16 %v1023, %v1022
        %v1086 = vpack.c.b16 %v1025, %v1024
        %v1087 = vpack.c.b16 %v1027, %v1026
        %v1088 = vpack.c.b16 %v1029, %v1028
        %v1089 = vpack.c.b16 %v1031, %v1030
        %v1090 = vpack.c.b16 %v1033, %v1032
        %v1091 = vpack.c.b16 %v1035, %v1034
        %v1092 = vpack.c.b16 %v1037, %v1036
        %v1093 = vpack.c.b16 %v1039, %v1038
        %v1094 = vpack.c.b16 %v1041, %v1040
        %v1095 = vpack.c.b16 %v1043, %v1042
        %v1096 = vpack.c.b16 %v1045, %v1044
        %v1097 = vpack.c.b16 %v1047, %v1046
        %v1098 = vpack.c.b16 %v1049, %v1048
        %v1099 = vpack.c.b16 %v1051, %v1050
        %v1100 = vpack.c.b16 %v1053, %v1052
        %v1101 = vpack.c.b16 %v1055, %v1054
        %v1102 = vpack.c.b16 %v1057, %v1056
        %v1103 = vpack.c.b16 %v1059, %v1058
        %v1104 = vpack.c.b16 %v1061, %v1060
        %v1105 = vpack.c.b16 %v1063, %v1062
        %v1106 = vpack.c.b16 %v1065, %v1064
        %v1107 = vpack.c.b16 %v1067, %v1066
        %v1108 = vpack.c.b16 %v1069, %v1068
        %v1109 = vpack.c.b16 %v1071, %v1070
        %v1110 = vpack.c.b16 %v1073, %v1072
        %v1111 = vpack.c.b16 %v1075, %v1074
        %v1112 = vpack.c.b16 %v1077, %v1076
        %v1113 = vpack.c.b16 %v1079, %v1078
        %v1114 = vpack.c.b16 %v1081, %v1080
        %v1115 = vpack.c.b16 %v1083, %v1082
        %1148 = vst [vmem:[%s204] sm:$0xff] %v1084
        %1149 = vst [vmem:[%s204 + $0x8] sm:$0xff] %v1085
        %1150 = vst [vmem:[%s204 + $0x10] sm:$0xff] %v1086
        %1151 = vst [vmem:[%s204 + $0x18] sm:$0xff] %v1087
        %1152 = vst [vmem:[%s204 + $0x20] sm:$0xff] %v1088
        %1153 = vst [vmem:[%s204 + $0x28] sm:$0xff] %v1089
        %1154 = vst [vmem:[%s204 + $0x30] sm:$0xff] %v1090
        %1155 = vst [vmem:[%s204 + $0x38] sm:$0xff] %v1091
        %1156 = vst [vmem:[%s204 + $0x40] sm:$0xff] %v1092
        %1157 = vst [vmem:[%s204 + $0x48] sm:$0xff] %v1093
        %1158 = vst [vmem:[%s204 + $0x50] sm:$0xff] %v1094
        %1159 = vst [vmem:[%s204 + $0x58] sm:$0xff] %v1095
        %1160 = vst [vmem:[%s204 + $0x60] sm:$0xff] %v1096
        %1161 = vst [vmem:[%s204 + $0x68] sm:$0xff] %v1097
        %1162 = vst [vmem:[%s204 + $0x70] sm:$0xff] %v1098
        %1163 = vst [vmem:[%s204 + $0x78] sm:$0xff] %v1099
        %1164 = vst [vmem:[%s204 + $0x80] sm:$0xff] %v1100
        %1165 = vst [vmem:[%s204 + $0x88] sm:$0xff] %v1101
        %1166 = vst [vmem:[%s204 + $0x90] sm:$0xff] %v1102
        %1167 = vst [vmem:[%s204 + $0x98] sm:$0xff] %v1103
        %1168 = vst [vmem:[%s204 + $0xa0] sm:$0xff] %v1104
        %1169 = vst [vmem:[%s204 + $0xa8] sm:$0xff] %v1105
        %1170 = vst [vmem:[%s204 + $0xb0] sm:$0xff] %v1106
        %1171 = vst [vmem:[%s204 + $0xb8] sm:$0xff] %v1107
        %1172 = vst [vmem:[%s204 + $0xc0] sm:$0xff] %v1108
        %1173 = vst [vmem:[%s204 + $0xc8] sm:$0xff] %v1109
        %1174 = vst [vmem:[%s204 + $0xd0] sm:$0xff] %v1110
        %1175 = vst [vmem:[%s204 + $0xd8] sm:$0xff] %v1111
        %1176 = vst [vmem:[%s204 + $0xe0] sm:$0xff] %v1112
        %1177 = vst [vmem:[%s204 + $0xe8] sm:$0xff] %v1113
        %1178 = vst [vmem:[%s204 + $0xf0] sm:$0xff] %v1114
        %1179 = vst [vmem:[%s204 + $0xf8] sm:$0xff] %v1115
        %s1180 = sand.u32 %s97, 1
        %s1181 = scalar_lea.sflag [#allocation4], %s1180
        %s1182 = sand.u32 %s97, 1
        %s1183 = smul.addr %s1182, 256
        %s1184 = scalar_lea.vmem [#allocation7], %s1183
        // Predicated region
        $region41: #{keygen_forward.1} parent=31 // pred_check
          %p1185 = pneg %p107
        $region42: #{keygen_forward.1} parent=31 // pred_check_branch
          %1187 = sbr.rel (%p1185) target = $region44
        $region43: #{keygen_forward.1} parent=31 // pred_region
          %s1188 = smul.u32 32, %s21
          %s1190 = ssub.s32 4096, 4096
          %1191 = vsyncadd %s1181, %s1190
          %s1192 = smul.addr %s1188, 2
          %s1193 = smul.addr %s1192, 64
          %s1194 = scalar_lea.hbm %s3, %s1193
          %s1195 = sshll.u32 %s1184, 4
          %s1196 = int_to_ptr.vmem [resolvable:$true] %s1195
          %1201 = dma.vmem_to_hbm [thread:$0]  %s1196, 4096, %s1194, %s1181, 128, 128, 8
        $region44: #{keygen_forward.1} parent=31 // pred_fallthru
          _
      $region32: #{keygen_forward.1} parent=5 // pred_fallthru
        _
      %p1202 = scmp.le.s32.totalorder 2, %s16
      // Predicated region
      $region45: #{keygen_forward.1} parent=5 // pred_check
        %p1203 = pneg %p1202
      $region46: #{keygen_forward.1} parent=5 // pred_check_branch
        %1205 = sbr.rel (%p1203) target = $region48
      $region47: #{keygen_forward.1} parent=5 // pred_region
        %s1206 = ssub.s32 %s16, 2
        // Predicated region
        $region49: #{keygen_forward.1} parent=47 // pred_check
          %p1207 = pneg %p113
        $region50: #{keygen_forward.1} parent=47 // pred_check_branch
          %1209 = sbr.rel (%p1207) target = $region52
        $region51: #{keygen_forward.1} parent=47 // pred_region
          %s1210 = sand.u32 %s98, 1
          %s1211 = scalar_lea.sflag [#allocation4], %s1210
          %s1212 = sand.u32 %s98, 1
          %s1213 = smul.addr %s1212, 256
          %s1214 = scalar_lea.vmem [#allocation7], %s1213
          %1215 = dma.done %s1211, 4096
        $region52: #{keygen_forward.1} parent=47 // pred_fallthru
          _
      $region48: #{keygen_forward.1} parent=5 // pred_fallthru
        _
    $region6: #{keygen_forward.1} parent=1 // loop_footer
      %s20 = sadd.s32 1, %s16
    $region7: #{keygen_forward.1} parent=1 // loop_footer_branch
      %15 = sbr.rel target = $region3
    $region8: #{keygen_forward.1} parent=1 // loop_exit
      _
    %1216 = vsyncpa [#allocation3], 1
    %s1217 = scalar_lea.sflag [#allocation3], 1
    %1218 = vsyncpa %s1217, 1
    %1219 = vsyncpa [#allocation6], 1
    %1220 = vsyncpa [#allocation4], 1
    %s1221 = scalar_lea.sflag [#allocation4], 1
    %1222 = vsyncpa %s1221, 1

</llo_original>
